<compile_context>
chip_gen: v7x
topology: tpu7x:2x2x1
jax: 0.10.0
libtpu: 0.0.40
codegen_flags: <defaults>
</compile_context>

<pallas_src>
import functools

import jax
import jax.numpy as jnp
from jax import lax
from jax.experimental import pallas as pl
from jax.experimental.pallas import tpu as pltpu

# ---------------- config (small, deterministic) ----------------
BATCH = 2
SEQ = 8
HIDDEN = 32
NUM_HEADS = 4
HEAD_DIM = HIDDEN // NUM_HEADS
INTERMEDIATE = 64
LN_EPS = 1e-5
NEG_INF = -1e30


# ---------------- kernel ----------------
def _layer_norm(x, gamma, beta):
    # x: (T, H), gamma/beta: (1, H)  -- PyTorch LayerNorm (biased variance, eps inside sqrt)
    mu = jnp.mean(x, axis=-1, keepdims=True)
    var = jnp.mean((x - mu) * (x - mu), axis=-1, keepdims=True)
    return (x - mu) * lax.rsqrt(var + LN_EPS) * gamma + beta


def encoder_layer_kernel(
    x_ref,
    ln1_g_ref, ln1_b_ref,
    wq_ref, bq_ref, wk_ref, bk_ref, wv_ref, bv_ref, wo_ref, bo_ref,
    ln2_g_ref, ln2_b_ref,
    w1_ref, b1_ref, w2_ref, b2_ref,
    head_mask_ref, attn_bias_ref,
    out_ref,
    *, num_heads, head_dim, tokens,
):
    T = tokens

    # ---- hoist all loads (biases / LN params read exactly once) ----
    x = x_ref[...]                               # (T, H) float32, T = B*S
    ln1_g = ln1_g_ref[...]; ln1_b = ln1_b_ref[...]
    ln2_g = ln2_g_ref[...]; ln2_b = ln2_b_ref[...]
    wq = wq_ref[...]; bq = bq_ref[...]
    wk = wk_ref[...]; bk = bk_ref[...]
    wv = wv_ref[...]; bv = bv_ref[...]
    wo = wo_ref[...]; bo = bo_ref[...]
    w1 = w1_ref[...]; b1 = b1_ref[...]
    w2 = w2_ref[...]; b2 = b2_ref[...]
    head_mask = head_mask_ref[...]               # (nh*T, H)  1.0 where column belongs to row-block's head
    attn_bias = attn_bias_ref[...]               # (nh*T, T)  0.0 same-batch / -1e30 cross-batch

    # ---- LayerNorm 1 ----
    h1 = _layer_norm(x, ln1_g, ln1_b)

    # ---- Q/K/V projections (full-width matmuls) ----
    q = jnp.dot(h1, wq, preferred_element_type=jnp.float32) + bq    # (T, H)
    k = jnp.dot(h1, wk, preferred_element_type=jnp.float32) + bk
    v = jnp.dot(h1, wv, preferred_element_type=jnp.float32) + bv

    # ---- all heads + all batches fused attention ----
    # Replicate Q head-major along tokens and zero out non-head columns: row
    # h*T+q only keeps head h's columns, so one matmul against K (contracting
    # the hidden axis, no transpose) yields per-head scores stacked on sublanes.
    q_rep = jnp.concatenate([q] * num_heads, axis=0)                # (nh*T, H)
    q_m = q_rep * head_mask

    scale = 1.0 / (head_dim ** 0.5)
    scores = lax.dot_general(                                       # (nh*T, T)
        q_m, k, (((1,), (1,)), ((), ())),
        preferred_element_type=jnp.float32,
    ) * scale
    scores = scores + attn_bias                                     # mask cross-batch keys
    scores = scores - jnp.max(scores, axis=-1, keepdims=True)
    p = jnp.exp(scores)
    p = p * pl.reciprocal(jnp.sum(p, axis=-1, keepdims=True), approx=True)

    # One matmul for P@V over all heads; then keep only each row-block's own
    # head columns and fold the nh sublane blocks back onto (T, H).
    c = jnp.dot(p, v, preferred_element_type=jnp.float32)           # (nh*T, H)
    c = c * head_mask
    ctx = c[0:T, :]
    for h in range(1, num_heads):                                   # static, sublane-aligned slices
        ctx = ctx + c[h * T:(h + 1) * T, :]                         # (T, H)

    attn_out = jnp.dot(ctx, wo, preferred_element_type=jnp.float32) + bo
    x = x + attn_out

    # ---- LayerNorm 2 + FeedForward (Linear -> GELU -> Linear) ----
    h2 = _layer_norm(x, ln2_g, ln2_b)
    ff = jnp.dot(h2, w1, preferred_element_type=jnp.float32) + b1
    ff = jax.nn.gelu(ff, approximate=True)
    ff = jnp.dot(ff, w2, preferred_element_type=jnp.float32) + b2

    out_ref[...] = (x + ff).astype(out_ref.dtype)


# ---------------- wrapper ----------------
def transformer_encoder_layer(x, params):
    B, S, H = x.shape
    T = B * S
    nh, dh = NUM_HEADS, HEAD_DIM
    f32 = jnp.float32

    # Flatten batch*seq outside the kernel (free in XLA); attention batch
    # separation is enforced in-kernel via the additive block mask below.
    x2 = x.reshape(T, H)

    # Constant masks, built with plain jnp outside the kernel.
    head_row = jnp.arange(nh * T, dtype=jnp.int32) // T             # head id per stacked row
    head_col = jnp.arange(H, dtype=jnp.int32) // dh                 # head id per hidden column
    head_mask = (head_row[:, None] == head_col[None, :]).astype(f32)            # (nh*T, H)

    tok_row = jnp.arange(nh * T, dtype=jnp.int32) % T
    batch_row = tok_row // S
    batch_col = jnp.arange(T, dtype=jnp.int32) // S
    attn_bias = jnp.where(batch_row[:, None] == batch_col[None, :],
                          jnp.float32(0.0), jnp.float32(NEG_INF))               # (nh*T, T)

    vmem = pl.BlockSpec(memory_space=pltpu.MemorySpace.VMEM)
    n_inputs = 19

    kernel = functools.partial(
        encoder_layer_kernel, num_heads=nh, head_dim=dh, tokens=T
    )

    out2 = pl.pallas_call(
        kernel,
        out_shape=jax.ShapeDtypeStruct((T, H), x.dtype),
        in_specs=[vmem] * n_inputs,      # whole arrays resident in VMEM, single invocation
        out_specs=vmem,
    )(
        x2,
        params["ln1_g"], params["ln1_b"],
        params["wq"], params["bq"], params["wk"], params["bk"],
        params["wv"], params["bv"], params["wo"], params["bo"],
        params["ln2_g"], params["ln2_b"],
        params["w1"], params["b1"], params["w2"], params["b2"],
        head_mask, attn_bias,
    )
    return out2.reshape(B, S, H)


# ---------------- pure-JAX reference (for sanity check) ----------------
def reference(x, p):
    def ln(t, g, b):
        mu = jnp.mean(t, axis=-1, keepdims=True)
        var = jnp.mean((t - mu) ** 2, axis=-1, keepdims=True)
        return (t - mu) / jnp.sqrt(var + LN_EPS) * g + b

    h1 = ln(x, p["ln1_g"], p["ln1_b"])
    q = h1 @ p["wq"] + p["bq"]
    k = h1 @ p["wk"] + p["bk"]
    v = h1 @ p["wv"] + p["bv"]
    B, S, H = x.shape
    q = q.reshape(B, S, NUM_HEADS, HEAD_DIM).transpose(0, 2, 1, 3)
    k = k.reshape(B, S, NUM_HEADS, HEAD_DIM).transpose(0, 2, 1, 3)
    v = v.reshape(B, S, NUM_HEADS, HEAD_DIM).transpose(0, 2, 1, 3)
    scores = jnp.einsum("bhqd,bhkd->bhqk", q, k) / (HEAD_DIM ** 0.5)
    probs = jax.nn.softmax(scores, axis=-1)
    ctx = jnp.einsum("bhqk,bhkd->bhqd", probs, v).transpose(0, 2, 1, 3).reshape(B, S, H)
    x = x + ctx @ p["wo"] + p["bo"]
    h2 = ln(x, p["ln2_g"], p["ln2_b"])
    ff = jax.nn.gelu(h2 @ p["w1"] + p["b1"], approximate=True) @ p["w2"] + p["b2"]
    return x + ff


# ---------------- param init ----------------
def init_params(key):
    ks = jax.random.split(key, 8)
    std = 0.02
    f32 = jnp.float32
    return {
        "ln1_g": jnp.ones((1, HIDDEN), f32),
        "ln1_b": jnp.zeros((1, HIDDEN), f32),
        "ln2_g": jnp.ones((1, HIDDEN), f32),
        "ln2_b": jnp.zeros((1, HIDDEN), f32),
        "wq": std * jax.random.normal(ks[0], (HIDDEN, HIDDEN), f32),
        "bq": jnp.zeros((1, HIDDEN), f32),
        "wk": std * jax.random.normal(ks[1], (HIDDEN, HIDDEN), f32),
        "bk": jnp.zeros((1, HIDDEN), f32),
        "wv": std * jax.random.normal(ks[2], (HIDDEN, HIDDEN), f32),
        "bv": jnp.zeros((1, HIDDEN), f32),
        "wo": std * jax.random.normal(ks[3], (HIDDEN, HIDDEN), f32),
        "bo": jnp.zeros((1, HIDDEN), f32),
        "w1": std * jax.random.normal(ks[4], (HIDDEN, INTERMEDIATE), f32),
        "b1": jnp.zeros((1, INTERMEDIATE), f32),
        "w2": std * jax.random.normal(ks[5], (INTERMEDIATE, HIDDEN), f32),
        "b2": jnp.zeros((1, HIDDEN), f32),
    }


if __name__ == "__main__":
    key = jax.random.PRNGKey(0)
    pkey, xkey = jax.random.split(key)
    params = init_params(pkey)
    x = jax.random.normal(xkey, (BATCH, SEQ, HIDDEN), jnp.float32)

    layer = jax.jit(transformer_encoder_layer)
    out = layer(x, params)
    out = jax.block_until_ready(out)

    ref = reference(x, params)
    assert out.shape == (BATCH, SEQ, HIDDEN)
    assert jnp.allclose(out, ref, rtol=1e-4, atol=1e-4), "mismatch vs JAX reference"

    print("KERNEL_OK")
</pallas_src>

<mosaic_0001>
module attributes {stable_mosaic.version = 11 : i64} {
  func.func @encoder_layer_kernel(%arg0: memref<16x32xf32, #tpu.memory_space<vmem>>, %arg1: memref<1x32xf32, #tpu.memory_space<vmem>>, %arg2: memref<1x32xf32, #tpu.memory_space<vmem>>, %arg3: memref<32x32xf32, #tpu.memory_space<vmem>>, %arg4: memref<1x32xf32, #tpu.memory_space<vmem>>, %arg5: memref<32x32xf32, #tpu.memory_space<vmem>>, %arg6: memref<1x32xf32, #tpu.memory_space<vmem>>, %arg7: memref<32x32xf32, #tpu.memory_space<vmem>>, %arg8: memref<1x32xf32, #tpu.memory_space<vmem>>, %arg9: memref<32x32xf32, #tpu.memory_space<vmem>>, %arg10: memref<1x32xf32, #tpu.memory_space<vmem>>, %arg11: memref<1x32xf32, #tpu.memory_space<vmem>>, %arg12: memref<1x32xf32, #tpu.memory_space<vmem>>, %arg13: memref<32x64xf32, #tpu.memory_space<vmem>>, %arg14: memref<1x64xf32, #tpu.memory_space<vmem>>, %arg15: memref<64x32xf32, #tpu.memory_space<vmem>>, %arg16: memref<1x32xf32, #tpu.memory_space<vmem>>, %arg17: memref<64x32xf32, #tpu.memory_space<vmem>>, %arg18: memref<64x16xf32, #tpu.memory_space<vmem>>, %arg19: memref<16x32xf32, #tpu.memory_space<vmem>>) attributes {dimension_semantics = [], scalar_prefetch = 0 : i64, scratch_operands = 0 : i64, tpu.core_type = #tpu.core_type<tc>} {
    %c0 = arith.constant 0 : index
    %c0_0 = arith.constant 0 : index
    %0 = vector.load %arg0[%c0, %c0_0] : memref<16x32xf32, #tpu.memory_space<vmem>>, vector<16x32xf32>
    %c0_1 = arith.constant 0 : index
    %c0_2 = arith.constant 0 : index
    %1 = vector.load %arg1[%c0_1, %c0_2] : memref<1x32xf32, #tpu.memory_space<vmem>>, vector<1x32xf32>
    %c0_3 = arith.constant 0 : index
    %c0_4 = arith.constant 0 : index
    %2 = vector.load %arg2[%c0_3, %c0_4] : memref<1x32xf32, #tpu.memory_space<vmem>>, vector<1x32xf32>
    %c0_5 = arith.constant 0 : index
    %c0_6 = arith.constant 0 : index
    %3 = vector.load %arg11[%c0_5, %c0_6] : memref<1x32xf32, #tpu.memory_space<vmem>>, vector<1x32xf32>
    %c0_7 = arith.constant 0 : index
    %c0_8 = arith.constant 0 : index
    %4 = vector.load %arg12[%c0_7, %c0_8] : memref<1x32xf32, #tpu.memory_space<vmem>>, vector<1x32xf32>
    %c0_9 = arith.constant 0 : index
    %c0_10 = arith.constant 0 : index
    %5 = vector.load %arg3[%c0_9, %c0_10] : memref<32x32xf32, #tpu.memory_space<vmem>>, vector<32x32xf32>
    %c0_11 = arith.constant 0 : index
    %c0_12 = arith.constant 0 : index
    %6 = vector.load %arg4[%c0_11, %c0_12] : memref<1x32xf32, #tpu.memory_space<vmem>>, vector<1x32xf32>
    %c0_13 = arith.constant 0 : index
    %c0_14 = arith.constant 0 : index
    %7 = vector.load %arg5[%c0_13, %c0_14] : memref<32x32xf32, #tpu.memory_space<vmem>>, vector<32x32xf32>
    %c0_15 = arith.constant 0 : index
    %c0_16 = arith.constant 0 : index
    %8 = vector.load %arg6[%c0_15, %c0_16] : memref<1x32xf32, #tpu.memory_space<vmem>>, vector<1x32xf32>
    %c0_17 = arith.constant 0 : index
    %c0_18 = arith.constant 0 : index
    %9 = vector.load %arg7[%c0_17, %c0_18] : memref<32x32xf32, #tpu.memory_space<vmem>>, vector<32x32xf32>
    %c0_19 = arith.constant 0 : index
    %c0_20 = arith.constant 0 : index
    %10 = vector.load %arg8[%c0_19, %c0_20] : memref<1x32xf32, #tpu.memory_space<vmem>>, vector<1x32xf32>
    %c0_21 = arith.constant 0 : index
    %c0_22 = arith.constant 0 : index
    %11 = vector.load %arg9[%c0_21, %c0_22] : memref<32x32xf32, #tpu.memory_space<vmem>>, vector<32x32xf32>
    %c0_23 = arith.constant 0 : index
    %c0_24 = arith.constant 0 : index
    %12 = vector.load %arg10[%c0_23, %c0_24] : memref<1x32xf32, #tpu.memory_space<vmem>>, vector<1x32xf32>
    %c0_25 = arith.constant 0 : index
    %c0_26 = arith.constant 0 : index
    %13 = vector.load %arg13[%c0_25, %c0_26] : memref<32x64xf32, #tpu.memory_space<vmem>>, vector<32x64xf32>
    %c0_27 = arith.constant 0 : index
    %c0_28 = arith.constant 0 : index
    %14 = vector.load %arg14[%c0_27, %c0_28] : memref<1x64xf32, #tpu.memory_space<vmem>>, vector<1x64xf32>
    %c0_29 = arith.constant 0 : index
    %c0_30 = arith.constant 0 : index
    %15 = vector.load %arg15[%c0_29, %c0_30] : memref<64x32xf32, #tpu.memory_space<vmem>>, vector<64x32xf32>
    %c0_31 = arith.constant 0 : index
    %c0_32 = arith.constant 0 : index
    %16 = vector.load %arg16[%c0_31, %c0_32] : memref<1x32xf32, #tpu.memory_space<vmem>>, vector<1x32xf32>
    %c0_33 = arith.constant 0 : index
    %c0_34 = arith.constant 0 : index
    %17 = vector.load %arg17[%c0_33, %c0_34] : memref<64x32xf32, #tpu.memory_space<vmem>>, vector<64x32xf32>
    %c0_35 = arith.constant 0 : index
    %c0_36 = arith.constant 0 : index
    %18 = vector.load %arg18[%c0_35, %c0_36] : memref<64x16xf32, #tpu.memory_space<vmem>>, vector<64x16xf32>
    %cst = arith.constant dense<0.000000e+00> : vector<16xf32>
    %19 = vector.multi_reduction <add>, %0, %cst [1] : vector<16x32xf32> to vector<16xf32>
    %20 = vector.shape_cast %19 : vector<16xf32> to vector<16x1xf32>
    %cst_37 = arith.constant 3.200000e+01 : f32
    %21 = vector.broadcast %cst_37 : f32 to vector<16x1xf32>
    %22 = arith.divf %20, %21 : vector<16x1xf32>
    %23 = vector.broadcast %22 : vector<16x1xf32> to vector<16x32xf32>
    %24 = arith.subf %0, %23 : vector<16x32xf32>
    %25 = vector.broadcast %22 : vector<16x1xf32> to vector<16x32xf32>
    %26 = arith.subf %0, %25 : vector<16x32xf32>
    %27 = arith.mulf %24, %26 : vector<16x32xf32>
    %cst_38 = arith.constant dense<0.000000e+00> : vector<16xf32>
    %28 = vector.multi_reduction <add>, %27, %cst_38 [1] : vector<16x32xf32> to vector<16xf32>
    %29 = vector.shape_cast %28 : vector<16xf32> to vector<16x1xf32>
    %cst_39 = arith.constant 3.200000e+01 : f32
    %30 = vector.broadcast %cst_39 : f32 to vector<16x1xf32>
    %31 = arith.divf %29, %30 : vector<16x1xf32>
    %32 = vector.broadcast %22 : vector<16x1xf32> to vector<16x32xf32>
    %33 = arith.subf %0, %32 : vector<16x32xf32>
    %cst_40 = arith.constant 9.99999974E-6 : f32
    %34 = vector.broadcast %cst_40 : f32 to vector<16x1xf32>
    %35 = arith.addf %31, %34 : vector<16x1xf32>
    %36 = math.rsqrt %35 : vector<16x1xf32>
    %37 = vector.broadcast %36 : vector<16x1xf32> to vector<16x32xf32>
    %38 = arith.mulf %33, %37 : vector<16x32xf32>
    %39 = vector.broadcast %1 : vector<1x32xf32> to vector<16x32xf32>
    %40 = arith.mulf %38, %39 : vector<16x32xf32>
    %41 = vector.broadcast %2 : vector<1x32xf32> to vector<16x32xf32>
    %42 = arith.addf %40, %41 : vector<16x32xf32>
    %cst_41 = arith.constant dense<0.000000e+00> : vector<16x32xf32>
    %43 = tpu.matmul %42, %5, %cst_41 {dimension_numbers = #tpu.dot_dimension_numbers<[1], [0], [0], [1], [0, 0, 1, 1], [], []>} : vector<16x32xf32>, vector<32x32xf32>, vector<16x32xf32> -> vector<16x32xf32>
    %44 = vector.broadcast %6 : vector<1x32xf32> to vector<16x32xf32>
    %45 = arith.addf %43, %44 : vector<16x32xf32>
    %cst_42 = arith.constant dense<0.000000e+00> : vector<16x32xf32>
    %46 = tpu.matmul %42, %7, %cst_42 {dimension_numbers = #tpu.dot_dimension_numbers<[1], [0], [0], [1], [0, 0, 1, 1], [], []>} : vector<16x32xf32>, vector<32x32xf32>, vector<16x32xf32> -> vector<16x32xf32>
    %47 = vector.broadcast %8 : vector<1x32xf32> to vector<16x32xf32>
    %48 = arith.addf %46, %47 : vector<16x32xf32>
    %cst_43 = arith.constant dense<0.000000e+00> : vector<16x32xf32>
    %49 = tpu.matmul %42, %9, %cst_43 {dimension_numbers = #tpu.dot_dimension_numbers<[1], [0], [0], [1], [0, 0, 1, 1], [], []>} : vector<16x32xf32>, vector<32x32xf32>, vector<16x32xf32> -> vector<16x32xf32>
    %50 = vector.broadcast %10 : vector<1x32xf32> to vector<16x32xf32>
    %51 = arith.addf %49, %50 : vector<16x32xf32>
    %52 = tpu.concatenate %45, %45, %45, %45 in 0 : vector<16x32xf32>, vector<16x32xf32>, vector<16x32xf32>, vector<16x32xf32> -> vector<64x32xf32>
    %53 = arith.mulf %52, %17 : vector<64x32xf32>
    %cst_44 = arith.constant dense<0.000000e+00> : vector<64x16xf32>
    %54 = tpu.matmul %53, %48, %cst_44 {dimension_numbers = #tpu.dot_dimension_numbers<[1], [1], [0], [0], [0, 0, 1, 0], [], []>} : vector<64x32xf32>, vector<16x32xf32>, vector<64x16xf32> -> vector<64x16xf32>
    %cst_45 = arith.constant 0.353553385 : f32
    %55 = vector.broadcast %cst_45 : f32 to vector<64x16xf32>
    %56 = arith.mulf %54, %55 : vector<64x16xf32>
    %57 = arith.addf %56, %18 : vector<64x16xf32>
    %cst_46 = arith.constant dense<0xFF800000> : vector<64xf32>
    %58 = vector.multi_reduction <maximumf>, %57, %cst_46 [1] : vector<64x16xf32> to vector<64xf32>
    %59 = vector.shape_cast %58 : vector<64xf32> to vector<64x1xf32>
    %60 = vector.broadcast %59 : vector<64x1xf32> to vector<64x16xf32>
    %61 = arith.subf %57, %60 : vector<64x16xf32>
    %62 = math.exp %61 : vector<64x16xf32>
    %cst_47 = arith.constant dense<0.000000e+00> : vector<64xf32>
    %63 = vector.multi_reduction <add>, %62, %cst_47 [1] : vector<64x16xf32> to vector<64xf32>
    %64 = vector.shape_cast %63 : vector<64xf32> to vector<64x1xf32>
    %65 = tpu.reciprocal %64 {approx = true} : vector<64x1xf32> -> vector<64x1xf32>
    %66 = vector.broadcast %65 : vector<64x1xf32> to vector<64x16xf32>
    %67 = arith.mulf %62, %66 : vector<64x16xf32>
    %cst_48 = arith.constant dense<0.000000e+00> : vector<64x32xf32>
    %68 = tpu.matmul %67, %51, %cst_48 {dimension_numbers = #tpu.dot_dimension_numbers<[1], [0], [0], [1], [0, 0, 1, 1], [], []>} : vector<64x16xf32>, vector<16x32xf32>, vector<64x32xf32> -> vector<64x32xf32>
    %69 = arith.mulf %68, %17 : vector<64x32xf32>
    %70 = vector.extract_strided_slice %69 {offsets = [0, 0], sizes = [16, 32], strides = [1, 1]} : vector<64x32xf32> to vector<16x32xf32>
    %71 = vector.extract_strided_slice %69 {offsets = [16, 0], sizes = [16, 32], strides = [1, 1]} : vector<64x32xf32> to vector<16x32xf32>
    %72 = arith.addf %70, %71 : vector<16x32xf32>
    %73 = vector.extract_strided_slice %69 {offsets = [32, 0], sizes = [16, 32], strides = [1, 1]} : vector<64x32xf32> to vector<16x32xf32>
    %74 = arith.addf %72, %73 : vector<16x32xf32>
    %75 = vector.extract_strided_slice %69 {offsets = [48, 0], sizes = [16, 32], strides = [1, 1]} : vector<64x32xf32> to vector<16x32xf32>
    %76 = arith.addf %74, %75 : vector<16x32xf32>
    %cst_49 = arith.constant dense<0.000000e+00> : vector<16x32xf32>
    %77 = tpu.matmul %76, %11, %cst_49 {dimension_numbers = #tpu.dot_dimension_numbers<[1], [0], [0], [1], [0, 0, 1, 1], [], []>} : vector<16x32xf32>, vector<32x32xf32>, vector<16x32xf32> -> vector<16x32xf32>
    %78 = vector.broadcast %12 : vector<1x32xf32> to vector<16x32xf32>
    %79 = arith.addf %77, %78 : vector<16x32xf32>
    %80 = arith.addf %0, %79 : vector<16x32xf32>
    %cst_50 = arith.constant dense<0.000000e+00> : vector<16xf32>
    %81 = vector.multi_reduction <add>, %80, %cst_50 [1] : vector<16x32xf32> to vector<16xf32>
    %82 = vector.shape_cast %81 : vector<16xf32> to vector<16x1xf32>
    %cst_51 = arith.constant 3.200000e+01 : f32
    %83 = vector.broadcast %cst_51 : f32 to vector<16x1xf32>
    %84 = arith.divf %82, %83 : vector<16x1xf32>
    %85 = vector.broadcast %84 : vector<16x1xf32> to vector<16x32xf32>
    %86 = arith.subf %80, %85 : vector<16x32xf32>
    %87 = vector.broadcast %84 : vector<16x1xf32> to vector<16x32xf32>
    %88 = arith.subf %80, %87 : vector<16x32xf32>
    %89 = arith.mulf %86, %88 : vector<16x32xf32>
    %cst_52 = arith.constant dense<0.000000e+00> : vector<16xf32>
    %90 = vector.multi_reduction <add>, %89, %cst_52 [1] : vector<16x32xf32> to vector<16xf32>
    %91 = vector.shape_cast %90 : vector<16xf32> to vector<16x1xf32>
    %cst_53 = arith.constant 3.200000e+01 : f32
    %92 = vector.broadcast %cst_53 : f32 to vector<16x1xf32>
    %93 = arith.divf %91, %92 : vector<16x1xf32>
    %94 = vector.broadcast %84 : vector<16x1xf32> to vector<16x32xf32>
    %95 = arith.subf %80, %94 : vector<16x32xf32>
    %cst_54 = arith.constant 9.99999974E-6 : f32
    %96 = vector.broadcast %cst_54 : f32 to vector<16x1xf32>
    %97 = arith.addf %93, %96 : vector<16x1xf32>
    %98 = math.rsqrt %97 : vector<16x1xf32>
    %99 = vector.broadcast %98 : vector<16x1xf32> to vector<16x32xf32>
    %100 = arith.mulf %95, %99 : vector<16x32xf32>
    %101 = vector.broadcast %3 : vector<1x32xf32> to vector<16x32xf32>
    %102 = arith.mulf %100, %101 : vector<16x32xf32>
    %103 = vector.broadcast %4 : vector<1x32xf32> to vector<16x32xf32>
    %104 = arith.addf %102, %103 : vector<16x32xf32>
    %cst_55 = arith.constant dense<0.000000e+00> : vector<16x64xf32>
    %105 = tpu.matmul %104, %13, %cst_55 {dimension_numbers = #tpu.dot_dimension_numbers<[1], [0], [0], [1], [0, 0, 1, 1], [], []>} : vector<16x32xf32>, vector<32x64xf32>, vector<16x64xf32> -> vector<16x64xf32>
    %106 = vector.broadcast %14 : vector<1x64xf32> to vector<16x64xf32>
    %107 = arith.addf %105, %106 : vector<16x64xf32>
    %108 = arith.mulf %107, %107 : vector<16x64xf32>
    %109 = arith.mulf %107, %108 : vector<16x64xf32>
    %cst_56 = arith.constant 4.471500e-02 : f32
    %110 = vector.broadcast %cst_56 : f32 to vector<16x64xf32>
    %111 = arith.mulf %110, %109 : vector<16x64xf32>
    %112 = arith.addf %107, %111 : vector<16x64xf32>
    %cst_57 = arith.constant 0.797884583 : f32
    %113 = vector.broadcast %cst_57 : f32 to vector<16x64xf32>
    %114 = arith.mulf %113, %112 : vector<16x64xf32>
    %115 = math.tanh %114 : vector<16x64xf32>
    %cst_58 = arith.constant 1.000000e+00 : f32
    %116 = vector.broadcast %cst_58 : f32 to vector<16x64xf32>
    %117 = arith.addf %116, %115 : vector<16x64xf32>
    %cst_59 = arith.constant 5.000000e-01 : f32
    %118 = vector.broadcast %cst_59 : f32 to vector<16x64xf32>
    %119 = arith.mulf %118, %117 : vector<16x64xf32>
    %120 = arith.mulf %107, %119 : vector<16x64xf32>
    %cst_60 = arith.constant dense<0.000000e+00> : vector<16x32xf32>
    %121 = tpu.matmul %120, %15, %cst_60 {dimension_numbers = #tpu.dot_dimension_numbers<[1], [0], [0], [1], [0, 0, 1, 1], [], []>} : vector<16x64xf32>, vector<64x32xf32>, vector<16x32xf32> -> vector<16x32xf32>
    %122 = vector.broadcast %16 : vector<1x32xf32> to vector<16x32xf32>
    %123 = arith.addf %121, %122 : vector<16x32xf32>
    %124 = arith.addf %80, %123 : vector<16x32xf32>
    %c0_61 = arith.constant 0 : index
    %c0_62 = arith.constant 0 : index
    %125 = vector.load %arg19[%c0_61, %c0_62] : memref<16x32xf32, #tpu.memory_space<vmem>>, vector<16x32xf32>
    tpu.vector_store %arg19[%c0_61, %c0_62], %124 {strides = array<i32>} : memref<16x32xf32, #tpu.memory_space<vmem>>, vector<16x32xf32>,
    return
  }
}

</mosaic_0001>

<llo_original>
// kernel: transformer_encoder_layer.1
$region0: #{transformer_encoder_layer.1}
  #allocation0 [shape = 'u32[]', space=smem, size = 0x4, offset = 0x4, fixed_abs, tag = 'smem constant byte address 0x4 - core index']
  #allocation1 [shape = 'u32[144,128]{1,0:T(1,128)}', space=vmem, size = 0x12000, scoped, tag = 'internal scratch']
  %s0 = inlined_call_operand.vmem [shape: f32[16,32], index: 0, kind: input, shape index: {}]
  %s1 = inlined_call_operand.vmem [shape: f32[1,32], index: 1, kind: input, shape index: {}]
  %s2 = inlined_call_operand.vmem [shape: f32[1,32], index: 2, kind: input, shape index: {}]
  %s3 = inlined_call_operand.vmem [shape: f32[32,32], index: 3, kind: input, shape index: {}]
  %s4 = inlined_call_operand.vmem [shape: f32[1,32], index: 4, kind: input, shape index: {}]
  %s5 = inlined_call_operand.vmem [shape: f32[32,32], index: 5, kind: input, shape index: {}]
  %s6 = inlined_call_operand.vmem [shape: f32[1,32], index: 6, kind: input, shape index: {}]
  %s7 = inlined_call_operand.vmem [shape: f32[32,32], index: 7, kind: input, shape index: {}]
  %s8 = inlined_call_operand.vmem [shape: f32[1,32], index: 8, kind: input, shape index: {}]
  %s9 = inlined_call_operand.vmem [shape: f32[32,32], index: 9, kind: input, shape index: {}]
  %s10 = inlined_call_operand.vmem [shape: f32[1,32], index: 10, kind: input, shape index: {}]
  %s11 = inlined_call_operand.vmem [shape: f32[1,32], index: 11, kind: input, shape index: {}]
  %s12 = inlined_call_operand.vmem [shape: f32[1,32], index: 12, kind: input, shape index: {}]
  %s13 = inlined_call_operand.vmem [shape: f32[32,64], index: 13, kind: input, shape index: {}]
  %s14 = inlined_call_operand.vmem [shape: f32[1,64], index: 14, kind: input, shape index: {}]
  %s15 = inlined_call_operand.vmem [shape: f32[64,32], index: 15, kind: input, shape index: {}]
  %s16 = inlined_call_operand.vmem [shape: f32[1,32], index: 16, kind: input, shape index: {}]
  %s17 = inlined_call_operand.vmem [shape: f32[64,32], index: 17, kind: input, shape index: {}]
  %s18 = inlined_call_operand.vmem [shape: f32[64,16], index: 18, kind: input, shape index: {}]
  %s19 = inlined_call_operand.hbm [shape: f32[16,32], index: 19, kind: output, shape index: {}]
  %s20 = sld [smem:[#allocation0]]
  $region86: #{transformer_encoder_layer.1} parent=0
    _
  %s22 = ssub.s32 1, %s20
  %s23 = scalar_select 0, %s22, %s20
  $region1: #{transformer_encoder_layer.1} parent=0
    #allocation2 [shape = 'u8[8192]{0}', space=vmem, size = 0x2000, scoped, tag = 'output window, operand 0, single buffered']
    #allocation3 [shape = 's32[1]{0}', space=sflag, size = 0x4, scoped, tag = 'scoped memory for transformer_encoder_layer.1']
    %24 = vsyncpa [#allocation3], 0
    // Predicated region
    $region2: #{transformer_encoder_layer.1} parent=1 // pred_check
      _
    $region3: #{transformer_encoder_layer.1} parent=1 // pred_check_branch
      %26 = sbr.rel (0) target = $region5
    $region4: #{transformer_encoder_layer.1} parent=1 // pred_region
      _
    $region5: #{transformer_encoder_layer.1} parent=1 // pred_fallthru
      _
    // Predicated region
    $region6: #{transformer_encoder_layer.1} parent=1 // pred_check
      _
    $region7: #{transformer_encoder_layer.1} parent=1 // pred_check_branch
      %28 = sbr.rel (0) target = $region9
    $region8: #{transformer_encoder_layer.1} parent=1 // pred_region
      _
    $region9: #{transformer_encoder_layer.1} parent=1 // pred_fallthru
      _
    // Predicated region
    $region10: #{transformer_encoder_layer.1} parent=1 // pred_check
      _
    $region11: #{transformer_encoder_layer.1} parent=1 // pred_check_branch
      %30 = sbr.rel (0) target = $region13
    $region12: #{transformer_encoder_layer.1} parent=1 // pred_region
      _
    $region13: #{transformer_encoder_layer.1} parent=1 // pred_fallthru
      _
    // Predicated region
    $region14: #{transformer_encoder_layer.1} parent=1 // pred_check
      _
    $region15: #{transformer_encoder_layer.1} parent=1 // pred_check_branch
      %32 = sbr.rel (0) target = $region17
    $region16: #{transformer_encoder_layer.1} parent=1 // pred_region
      _
    $region17: #{transformer_encoder_layer.1} parent=1 // pred_fallthru
      _
    // Predicated region
    $region18: #{transformer_encoder_layer.1} parent=1 // pred_check
      _
    $region19: #{transformer_encoder_layer.1} parent=1 // pred_check_branch
      %34 = sbr.rel (0) target = $region21
    $region20: #{transformer_encoder_layer.1} parent=1 // pred_region
      _
    $region21: #{transformer_encoder_layer.1} parent=1 // pred_fallthru
      _
    // Predicated region
    $region22: #{transformer_encoder_layer.1} parent=1 // pred_check
      _
    $region23: #{transformer_encoder_layer.1} parent=1 // pred_check_branch
      %36 = sbr.rel (0) target = $region25
    $region24: #{transformer_encoder_layer.1} parent=1 // pred_region
      _
    $region25: #{transformer_encoder_layer.1} parent=1 // pred_fallthru
      _
    // Predicated region
    $region26: #{transformer_encoder_layer.1} parent=1 // pred_check
      _
    $region27: #{transformer_encoder_layer.1} parent=1 // pred_check_branch
      %38 = sbr.rel (0) target = $region29
    $region28: #{transformer_encoder_layer.1} parent=1 // pred_region
      _
    $region29: #{transformer_encoder_layer.1} parent=1 // pred_fallthru
      _
    // Predicated region
    $region30: #{transformer_encoder_layer.1} parent=1 // pred_check
      _
    $region31: #{transformer_encoder_layer.1} parent=1 // pred_check_branch
      %40 = sbr.rel (0) target = $region33
    $region32: #{transformer_encoder_layer.1} parent=1 // pred_region
      _
    $region33: #{transformer_encoder_layer.1} parent=1 // pred_fallthru
      _
    // Predicated region
    $region34: #{transformer_encoder_layer.1} parent=1 // pred_check
      _
    $region35: #{transformer_encoder_layer.1} parent=1 // pred_check_branch
      %42 = sbr.rel (0) target = $region37
    $region36: #{transformer_encoder_layer.1} parent=1 // pred_region
      _
    $region37: #{transformer_encoder_layer.1} parent=1 // pred_fallthru
      _
    // Predicated region
    $region38: #{transformer_encoder_layer.1} parent=1 // pred_check
      _
    $region39: #{transformer_encoder_layer.1} parent=1 // pred_check_branch
      %44 = sbr.rel (0) target = $region41
    $region40: #{transformer_encoder_layer.1} parent=1 // pred_region
      _
    $region41: #{transformer_encoder_layer.1} parent=1 // pred_fallthru
      _
    // Predicated region
    $region42: #{transformer_encoder_layer.1} parent=1 // pred_check
      _
    $region43: #{transformer_encoder_layer.1} parent=1 // pred_check_branch
      %46 = sbr.rel (0) target = $region45
    $region44: #{transformer_encoder_layer.1} parent=1 // pred_region
      _
    $region45: #{transformer_encoder_layer.1} parent=1 // pred_fallthru
      _
    // Predicated region
    $region46: #{transformer_encoder_layer.1} parent=1 // pred_check
      _
    $region47: #{transformer_encoder_layer.1} parent=1 // pred_check_branch
      %48 = sbr.rel (0) target = $region49
    $region48: #{transformer_encoder_layer.1} parent=1 // pred_region
      _
    $region49: #{transformer_encoder_layer.1} parent=1 // pred_fallthru
      _
    // Predicated region
    $region50: #{transformer_encoder_layer.1} parent=1 // pred_check
      _
    $region51: #{transformer_encoder_layer.1} parent=1 // pred_check_branch
      %50 = sbr.rel (0) target = $region53
    $region52: #{transformer_encoder_layer.1} parent=1 // pred_region
      _
    $region53: #{transformer_encoder_layer.1} parent=1 // pred_fallthru
      _
    // Predicated region
    $region54: #{transformer_encoder_layer.1} parent=1 // pred_check
      _
    $region55: #{transformer_encoder_layer.1} parent=1 // pred_check_branch
      %52 = sbr.rel (0) target = $region57
    $region56: #{transformer_encoder_layer.1} parent=1 // pred_region
      _
    $region57: #{transformer_encoder_layer.1} parent=1 // pred_fallthru
      _
    // Predicated region
    $region58: #{transformer_encoder_layer.1} parent=1 // pred_check
      _
    $region59: #{transformer_encoder_layer.1} parent=1 // pred_check_branch
      %54 = sbr.rel (0) target = $region61
    $region60: #{transformer_encoder_layer.1} parent=1 // pred_region
      _
    $region61: #{transformer_encoder_layer.1} parent=1 // pred_fallthru
      _
    // Predicated region
    $region62: #{transformer_encoder_layer.1} parent=1 // pred_check
      _
    $region63: #{transformer_encoder_layer.1} parent=1 // pred_check_branch
      %56 = sbr.rel (0) target = $region65
    $region64: #{transformer_encoder_layer.1} parent=1 // pred_region
      _
    $region65: #{transformer_encoder_layer.1} parent=1 // pred_fallthru
      _
    // Predicated region
    $region66: #{transformer_encoder_layer.1} parent=1 // pred_check
      _
    $region67: #{transformer_encoder_layer.1} parent=1 // pred_check_branch
      %58 = sbr.rel (0) target = $region69
    $region68: #{transformer_encoder_layer.1} parent=1 // pred_region
      _
    $region69: #{transformer_encoder_layer.1} parent=1 // pred_fallthru
      _
    // Predicated region
    $region70: #{transformer_encoder_layer.1} parent=1 // pred_check
      _
    $region71: #{transformer_encoder_layer.1} parent=1 // pred_check_branch
      %60 = sbr.rel (0) target = $region73
    $region72: #{transformer_encoder_layer.1} parent=1 // pred_region
      _
    $region73: #{transformer_encoder_layer.1} parent=1 // pred_fallthru
      _
    // Predicated region
    $region74: #{transformer_encoder_layer.1} parent=1 // pred_check
      _
    $region75: #{transformer_encoder_layer.1} parent=1 // pred_check_branch
      %62 = sbr.rel (0) target = $region77
    $region76: #{transformer_encoder_layer.1} parent=1 // pred_region
      _
    $region77: #{transformer_encoder_layer.1} parent=1 // pred_fallthru
      _
    %v63 = vld [vmem:[%s0] sm:$0xff]
    %v64 = vld [vmem:[%s0 + $0x8] sm:$0xff]
    %v65 = vld [vmem:[%s1] sm:$0x1]
    %v66 = vld [vmem:[%s2] sm:$0x1]
    %v67 = vld [vmem:[%s11] sm:$0x1]
    %v68 = vld [vmem:[%s12] sm:$0x1]
    %v69 = vld [vmem:[%s3] sm:$0xff]
    %v70 = vld [vmem:[%s3 + $0x8] sm:$0xff]
    %v71 = vld [vmem:[%s3 + $0x10] sm:$0xff]
    %v72 = vld [vmem:[%s3 + $0x18] sm:$0xff]
    %v73 = vld [vmem:[%s4] sm:$0x1]
    %v74 = vld [vmem:[%s5] sm:$0xff]
    %v75 = vld [vmem:[%s5 + $0x8] sm:$0xff]
    %v76 = vld [vmem:[%s5 + $0x10] sm:$0xff]
    %v77 = vld [vmem:[%s5 + $0x18] sm:$0xff]
    %v78 = vld [vmem:[%s6] sm:$0x1]
    %v79 = vld [vmem:[%s7] sm:$0xff]
    %v80 = vld [vmem:[%s7 + $0x8] sm:$0xff]
    %v81 = vld [vmem:[%s7 + $0x10] sm:$0xff]
    %v82 = vld [vmem:[%s7 + $0x18] sm:$0xff]
    %v83 = vld [vmem:[%s8] sm:$0x1]
    %v84 = vld [vmem:[%s9] sm:$0xff]
    %v85 = vld [vmem:[%s9 + $0x8] sm:$0xff]
    %v86 = vld [vmem:[%s9 + $0x10] sm:$0xff]
    %v87 = vld [vmem:[%s9 + $0x18] sm:$0xff]
    %v88 = vld [vmem:[%s10] sm:$0x1]
    %v89 = vld [vmem:[%s13] sm:$0xff]
    %v90 = vld [vmem:[%s13 + $0x8] sm:$0xff]
    %v91 = vld [vmem:[%s13 + $0x10] sm:$0xff]
    %v92 = vld [vmem:[%s13 + $0x18] sm:$0xff]
    %v93 = vld [vmem:[%s14] sm:$0x1]
    %v94 = vld [vmem:[%s15] sm:$0xff]
    %v95 = vld [vmem:[%s15 + $0x8] sm:$0xff]
    %v96 = vld [vmem:[%s15 + $0x10] sm:$0xff]
    %v97 = vld [vmem:[%s15 + $0x18] sm:$0xff]
    %v98 = vld [vmem:[%s15 + $0x20] sm:$0xff]
    %v99 = vld [vmem:[%s15 + $0x28] sm:$0xff]
    %v100 = vld [vmem:[%s15 + $0x30] sm:$0xff]
    %v101 = vld [vmem:[%s15 + $0x38] sm:$0xff]
    %v102 = vld [vmem:[%s16] sm:$0x1]
    %v103 = vld [vmem:[%s17] sm:$0xff]
    %v104 = vld [vmem:[%s17 + $0x8] sm:$0xff]
    %v105 = vld [vmem:[%s17 + $0x10] sm:$0xff]
    %v106 = vld [vmem:[%s17 + $0x18] sm:$0xff]
    %v107 = vld [vmem:[%s17 + $0x20] sm:$0xff]
    %v108 = vld [vmem:[%s17 + $0x28] sm:$0xff]
    %v109 = vld [vmem:[%s17 + $0x30] sm:$0xff]
    %v110 = vld [vmem:[%s17 + $0x38] sm:$0xff]
    %v111 = vld [vmem:[%s18] sm:$0xff]
    %v112 = vld [vmem:[%s18 + $0x8] sm:$0xff]
    %v113 = vld [vmem:[%s18 + $0x10] sm:$0xff]
    %v114 = vld [vmem:[%s18 + $0x18] sm:$0xff]
    %v115 = vld [vmem:[%s18 + $0x20] sm:$0xff]
    %v116 = vld [vmem:[%s18 + $0x28] sm:$0xff]
    %v117 = vld [vmem:[%s18 + $0x30] sm:$0xff]
    %v118 = vld [vmem:[%s18 + $0x38] sm:$0xff]
    %vm119 = vcmask 261120
    %v120 = vsel %vm119, %v63, 0.0
    %121 = vadd.xlane.f32.xlu0 %v120
    %v122 = vpop.xlane.xlu0 %121
    %v123 = vsel %vm119, %v64, 0.0
    %124 = vadd.xlane.f32.xlu0 %v123
    %v125 = vpop.xlane.xlu0 %124
    %v126 = vrcp.pop 32.0
    %v127 = vmul.f32 %v122, %v126
    %v128 = vmul.f32 %v125, %v126
    %v129 = vsub.f32 %v63, %v127
    %v130 = vsub.f32 %v64, %v128
    %v131 = vmul.f32 %v129, %v129
    %v132 = vmul.f32 %v130, %v130
    %v133 = vsel %vm119, %v131, 0.0
    %134 = vadd.xlane.f32.xlu0 %v133
    %v135 = vpop.xlane.xlu0 %134
    %v136 = vsel %vm119, %v132, 0.0
    %137 = vadd.xlane.f32.xlu0 %v136
    %v138 = vpop.xlane.xlu0 %137
    %v139 = vmul.f32 %v135, %v126
    %v140 = vmul.f32 %v138, %v126
    %v141 = vadd.f32 %v139, 1e-05
    %v142 = vadd.f32 %v140, 1e-05
    %v143 = vrsqrt.pop %v141
    %v144 = vrsqrt.pop %v142
    %v145 = vmul.f32 %v129, %v143
    %v146 = vmul.f32 %v130, %v144
    %v148 = vlaneseq
    %v149 = vshrl.u32 %v148, 7
    %v150 = vsub.s32 0, %v149
    %v151 = vrot.slane %v65, %v150
    %v153 = vmul.f32 %v145, %v151
    %v154 = vmul.f32 %v146, %v151
    %v156 = vlaneseq
    %v157 = vshrl.u32 %v156, 7
    %v158 = vsub.s32 0, %v157
    %v159 = vrot.slane %v66, %v158
    %v161 = vadd.f32 %v153, %v159
    %v162 = vadd.f32 %v154, %v159
    %v164 = vlaneseq
    %v165 = vshrl.u32 %v164, 7
    %v166 = vsub.s32 0, %v165
    %v167 = vrot.slane %v73, %v166
    %v170 = vsel %vm119, %v161, 0
    %v173 = vsel %vm119, %v162, 0
    %175 = vmatprep.subr.mxu0 0.0
    %176 = vmatpush1.msra.mxu0 %v69
    %177 = vmatprep.subr.mxu0 0.0
    %178 = vmatpush1.msra.mxu0 %v70
    %179 = vmatprep.subr.mxu0 0.0
    %180 = vmatpush1.msra.mxu0 %v71
    %181 = vmatprep.subr.mxu0 0.0
    %182 = vmatpush1.msra.mxu0 %v72
    %183 = vmatprep.subr.mxu0 0.0
    %184 = vmatpush1.msra.mxu0 0.0
    %185 = vmatprep.subr.mxu0 0.0
    %186 = vmatpush1.msra.mxu0 0.0
    %187 = vmatprep.subr.mxu0 0.0
    %188 = vmatpush1.msra.mxu0 0.0
    %189 = vmatprep.subr.mxu0 0.0
    %190 = vmatpush1.msra.mxu0 0.0
    %191 = vmatprep.subr.mxu0 0.0
    %192 = vmatpush1.msra.mxu0 0.0
    %193 = vmatprep.subr.mxu0 0.0
    %194 = vmatpush1.msra.mxu0 0.0
    %195 = vmatprep.subr.mxu0 0.0
    %196 = vmatpush1.msra.mxu0 0.0
    %197 = vmatprep.subr.mxu0 0.0
    %198 = vmatpush1.msra.mxu0 0.0
    %199 = vmatprep.subr.mxu0 0.0
    %200 = vmatpush1.msra.mxu0 0.0
    %201 = vmatprep.subr.mxu0 0.0
    %202 = vmatpush1.msra.mxu0 0.0
    %203 = vmatprep.subr.mxu0 0.0
    %204 = vmatpush1.msra.mxu0 0.0
    %205 = vmatprep.subr.mxu0 0.0
    %206 = vmatpush1.msra.mxu0 0.0
    %207 = vmatprep.subr.mxu0 0.0
    %208 = vmatpush1.msra.mxu0 0.0
    %209 = vmatprep.subr.mxu0 0.0
    %210 = vmatpush1.msra.mxu0 0.0
    %211 = vmatprep.subr.mxu0 0.0
    %212 = vmatpush1.msra.mxu0 0.0
    %213 = vmatprep.subr.mxu0 0.0
    %214 = vmatpush1.msra.mxu0 0.0
    %215 = vmatprep.subr.mxu0 0.0
    %216 = vmatpush1.msra.mxu0 0.0
    %217 = vmatprep.subr.mxu0 0.0
    %218 = vmatpush1.msra.mxu0 0.0
    %219 = vmatprep.subr.mxu0 0.0
    %220 = vmatpush1.msra.mxu0 0.0
    %221 = vmatprep.subr.mxu0 0.0
    %222 = vmatpush1.msra.mxu0 0.0
    %223 = vmatprep.subr.mxu0 0.0
    %224 = vmatpush1.msra.mxu0 0.0
    %225 = vmatprep.subr.mxu0 0.0
    %226 = vmatpush1.msra.mxu0 0.0
    %227 = vmatprep.subr.mxu0 0.0
    %228 = vmatpush1.msra.mxu0 0.0
    %229 = vmatprep.subr.mxu0 0.0
    %230 = vmatpush1.msra.mxu0 0.0
    %231 = vmatprep.subr.mxu0 0.0
    %232 = vmatpush1.msra.mxu0 0.0
    %233 = vmatprep.subr.mxu0 0.0
    %234 = vmatpush1.msra.mxu0 0.0
    %235 = vmatprep.subr.mxu0 0.0
    %236 = vmatpush1.msra.mxu0 0.0
    %237 = vmatprep.subr.mxu0 0.0
    %238 = vmatpush1.msra.mxu0 0.0
    %239 = vmatprep.mubr.f32.mxu0 0.0
    %240 = vmatmul.mubr.f32.gmra.mrb[0].mxu0 %v170
    %v241 = vpop.f32.mrb[0].mxu0
    %v242 = vadd.f32 %v167, %v241
    %v243 = vpop.f32.mrb[0].mxu0
    %244 = vmatprep.mubr.f32.mxu0 0.0
    %245 = vmatmul.mubr.f32.gmra.mrb[0].mxu0 %v173
    %v246 = vpop.f32.mrb[0].mxu0
    %v247 = vadd.f32 %v167, %v246
    %v248 = vpop.f32.mrb[0].mxu0
    %249 = vdwg.mxu0
    %v251 = vlaneseq
    %v252 = vshrl.u32 %v251, 7
    %v253 = vsub.s32 0, %v252
    %v254 = vrot.slane %v78, %v253
    %256 = vmatprep.subr.mxu0 0.0
    %257 = vmatpush1.msra.mxu0 %v74
    %258 = vmatprep.subr.mxu0 0.0
    %259 = vmatpush1.msra.mxu0 %v75
    %260 = vmatprep.subr.mxu0 0.0
    %261 = vmatpush1.msra.mxu0 %v76
    %262 = vmatprep.subr.mxu0 0.0
    %263 = vmatpush1.msra.mxu0 %v77
    %264 = vmatprep.subr.mxu0 0.0
    %265 = vmatpush1.msra.mxu0 0.0
    %266 = vmatprep.subr.mxu0 0.0
    %267 = vmatpush1.msra.mxu0 0.0
    %268 = vmatprep.subr.mxu0 0.0
    %269 = vmatpush1.msra.mxu0 0.0
    %270 = vmatprep.subr.mxu0 0.0
    %271 = vmatpush1.msra.mxu0 0.0
    %272 = vmatprep.subr.mxu0 0.0
    %273 = vmatpush1.msra.mxu0 0.0
    %274 = vmatprep.subr.mxu0 0.0
    %275 = vmatpush1.msra.mxu0 0.0
    %276 = vmatprep.subr.mxu0 0.0
    %277 = vmatpush1.msra.mxu0 0.0
    %278 = vmatprep.subr.mxu0 0.0
    %279 = vmatpush1.msra.mxu0 0.0
    %280 = vmatprep.subr.mxu0 0.0
    %281 = vmatpush1.msra.mxu0 0.0
    %282 = vmatprep.subr.mxu0 0.0
    %283 = vmatpush1.msra.mxu0 0.0
    %284 = vmatprep.subr.mxu0 0.0
    %285 = vmatpush1.msra.mxu0 0.0
    %286 = vmatprep.subr.mxu0 0.0
    %287 = vmatpush1.msra.mxu0 0.0
    %288 = vmatprep.subr.mxu0 0.0
    %289 = vmatpush1.msra.mxu0 0.0
    %290 = vmatprep.subr.mxu0 0.0
    %291 = vmatpush1.msra.mxu0 0.0
    %292 = vmatprep.subr.mxu0 0.0
    %293 = vmatpush1.msra.mxu0 0.0
    %294 = vmatprep.subr.mxu0 0.0
    %295 = vmatpush1.msra.mxu0 0.0
    %296 = vmatprep.subr.mxu0 0.0
    %297 = vmatpush1.msra.mxu0 0.0
    %298 = vmatprep.subr.mxu0 0.0
    %299 = vmatpush1.msra.mxu0 0.0
    %300 = vmatprep.subr.mxu0 0.0
    %301 = vmatpush1.msra.mxu0 0.0
    %302 = vmatprep.subr.mxu0 0.0
    %303 = vmatpush1.msra.mxu0 0.0
    %304 = vmatprep.subr.mxu0 0.0
    %305 = vmatpush1.msra.mxu0 0.0
    %306 = vmatprep.subr.mxu0 0.0
    %307 = vmatpush1.msra.mxu0 0.0
    %308 = vmatprep.subr.mxu0 0.0
    %309 = vmatpush1.msra.mxu0 0.0
    %310 = vmatprep.subr.mxu0 0.0
    %311 = vmatpush1.msra.mxu0 0.0
    %312 = vmatprep.subr.mxu0 0.0
    %313 = vmatpush1.msra.mxu0 0.0
    %314 = vmatprep.subr.mxu0 0.0
    %315 = vmatpush1.msra.mxu0 0.0
    %316 = vmatprep.subr.mxu0 0.0
    %317 = vmatpush1.msra.mxu0 0.0
    %318 = vmatprep.subr.mxu0 0.0
    %319 = vmatpush1.msra.mxu0 0.0
    %320 = vmatprep.mubr.f32.mxu0 0.0
    %321 = vmatmul.mubr.f32.gmra.mrb[0].mxu0 %v170
    %v322 = vpop.f32.mrb[0].mxu0
    %v323 = vadd.f32 %v254, %v322
    %v324 = vpop.f32.mrb[0].mxu0
    %325 = vmatprep.mubr.f32.mxu0 0.0
    %326 = vmatmul.mubr.f32.gmra.mrb[0].mxu0 %v173
    %v327 = vpop.f32.mrb[0].mxu0
    %v328 = vadd.f32 %v254, %v327
    %v329 = vpop.f32.mrb[0].mxu0
    %330 = vdwg.mxu0
    %v332 = vlaneseq
    %v333 = vshrl.u32 %v332, 7
    %v334 = vsub.s32 0, %v333
    %v335 = vrot.slane %v83, %v334
    %337 = vmatprep.subr.mxu0 0.0
    %338 = vmatpush1.msra.mxu0 %v79
    %339 = vmatprep.subr.mxu0 0.0
    %340 = vmatpush1.msra.mxu0 %v80
    %341 = vmatprep.subr.mxu0 0.0
    %342 = vmatpush1.msra.mxu0 %v81
    %343 = vmatprep.subr.mxu0 0.0
    %344 = vmatpush1.msra.mxu0 %v82
    %345 = vmatprep.subr.mxu0 0.0
    %346 = vmatpush1.msra.mxu0 0.0
    %347 = vmatprep.subr.mxu0 0.0
    %348 = vmatpush1.msra.mxu0 0.0
    %349 = vmatprep.subr.mxu0 0.0
    %350 = vmatpush1.msra.mxu0 0.0
    %351 = vmatprep.subr.mxu0 0.0
    %352 = vmatpush1.msra.mxu0 0.0
    %353 = vmatprep.subr.mxu0 0.0
    %354 = vmatpush1.msra.mxu0 0.0
    %355 = vmatprep.subr.mxu0 0.0
    %356 = vmatpush1.msra.mxu0 0.0
    %357 = vmatprep.subr.mxu0 0.0
    %358 = vmatpush1.msra.mxu0 0.0
    %359 = vmatprep.subr.mxu0 0.0
    %360 = vmatpush1.msra.mxu0 0.0
    %361 = vmatprep.subr.mxu0 0.0
    %362 = vmatpush1.msra.mxu0 0.0
    %363 = vmatprep.subr.mxu0 0.0
    %364 = vmatpush1.msra.mxu0 0.0
    %365 = vmatprep.subr.mxu0 0.0
    %366 = vmatpush1.msra.mxu0 0.0
    %367 = vmatprep.subr.mxu0 0.0
    %368 = vmatpush1.msra.mxu0 0.0
    %369 = vmatprep.subr.mxu0 0.0
    %370 = vmatpush1.msra.mxu0 0.0
    %371 = vmatprep.subr.mxu0 0.0
    %372 = vmatpush1.msra.mxu0 0.0
    %373 = vmatprep.subr.mxu0 0.0
    %374 = vmatpush1.msra.mxu0 0.0
    %375 = vmatprep.subr.mxu0 0.0
    %376 = vmatpush1.msra.mxu0 0.0
    %377 = vmatprep.subr.mxu0 0.0
    %378 = vmatpush1.msra.mxu0 0.0
    %379 = vmatprep.subr.mxu0 0.0
    %380 = vmatpush1.msra.mxu0 0.0
    %381 = vmatprep.subr.mxu0 0.0
    %382 = vmatpush1.msra.mxu0 0.0
    %383 = vmatprep.subr.mxu0 0.0
    %384 = vmatpush1.msra.mxu0 0.0
    %385 = vmatprep.subr.mxu0 0.0
    %386 = vmatpush1.msra.mxu0 0.0
    %387 = vmatprep.subr.mxu0 0.0
    %388 = vmatpush1.msra.mxu0 0.0
    %389 = vmatprep.subr.mxu0 0.0
    %390 = vmatpush1.msra.mxu0 0.0
    %391 = vmatprep.subr.mxu0 0.0
    %392 = vmatpush1.msra.mxu0 0.0
    %393 = vmatprep.subr.mxu0 0.0
    %394 = vmatpush1.msra.mxu0 0.0
    %395 = vmatprep.subr.mxu0 0.0
    %396 = vmatpush1.msra.mxu0 0.0
    %397 = vmatprep.subr.mxu0 0.0
    %398 = vmatpush1.msra.mxu0 0.0
    %399 = vmatprep.subr.mxu0 0.0
    %400 = vmatpush1.msra.mxu0 0.0
    %401 = vmatprep.mubr.f32.mxu0 0.0
    %402 = vmatmul.mubr.f32.gmra.mrb[0].mxu0 %v170
    %v403 = vpop.f32.mrb[0].mxu0
    %v404 = vadd.f32 %v335, %v403
    %v405 = vpop.f32.mrb[0].mxu0
    %406 = vmatprep.mubr.f32.mxu0 0.0
    %407 = vmatmul.mubr.f32.gmra.mrb[0].mxu0 %v173
    %v408 = vpop.f32.mrb[0].mxu0
    %v409 = vadd.f32 %v335, %v408
    %v410 = vpop.f32.mrb[0].mxu0
    %411 = vdwg.mxu0
    %v412 = vmul.f32 %v242, %v103
    %v413 = vmul.f32 %v247, %v104
    %v414 = vmul.f32 %v242, %v105
    %v415 = vmul.f32 %v247, %v106
    %v416 = vmul.f32 %v242, %v107
    %v417 = vmul.f32 %v247, %v108
    %v418 = vmul.f32 %v242, %v109
    %v419 = vmul.f32 %v247, %v110
    %v421 = vsel %vm119, %v412, 0
    %v424 = vsel %vm119, %v413, 0
    %v427 = vsel %vm119, %v414, 0
    %v430 = vsel %vm119, %v415, 0
    %v433 = vsel %vm119, %v416, 0
    %v436 = vsel %vm119, %v417, 0
    %v439 = vsel %vm119, %v418, 0
    %v442 = vsel %vm119, %v419, 0
    %v445 = vsel %vm119, %v323, 0
    %v448 = vsel %vm119, %v328, 0
    %450 = vmatprep.subr.mxu0 0.0
    %451 = vmatpush1.xpose.msra.mxu0 %v445
    %452 = vmatprep.subr.mxu0 0.0
    %453 = vmatpush1.xpose.msra.mxu0 %v448
    %454 = vmatprep.subr.mxu0 0.0
    %455 = vmatpush1.xpose.msra.mxu0 0.0
    %456 = vmatprep.subr.mxu0 0.0
    %457 = vmatpush1.xpose.msra.mxu0 0.0
    %458 = vmatprep.subr.mxu0 0.0
    %459 = vmatpush1.xpose.msra.mxu0 0.0
    %460 = vmatprep.subr.mxu0 0.0
    %461 = vmatpush1.xpose.msra.mxu0 0.0
    %462 = vmatprep.subr.mxu0 0.0
    %463 = vmatpush1.xpose.msra.mxu0 0.0
    %464 = vmatprep.subr.mxu0 0.0
    %465 = vmatpush1.xpose.msra.mxu0 0.0
    %466 = vmatprep.subr.mxu0 0.0
    %467 = vmatpush1.xpose.msra.mxu0 0.0
    %468 = vmatprep.subr.mxu0 0.0
    %469 = vmatpush1.xpose.msra.mxu0 0.0
    %470 = vmatprep.subr.mxu0 0.0
    %471 = vmatpush1.xpose.msra.mxu0 0.0
    %472 = vmatprep.subr.mxu0 0.0
    %473 = vmatpush1.xpose.msra.mxu0 0.0
    %474 = vmatprep.subr.mxu0 0.0
    %475 = vmatpush1.xpose.msra.mxu0 0.0
    %476 = vmatprep.subr.mxu0 0.0
    %477 = vmatpush1.xpose.msra.mxu0 0.0
    %478 = vmatprep.subr.mxu0 0.0
    %479 = vmatpush1.xpose.msra.mxu0 0.0
    %480 = vmatprep.subr.mxu0 0.0
    %481 = vmatpush1.xpose.msra.mxu0 0.0
    %482 = vmatprep.subr.mxu0 0.0
    %483 = vmatpush1.xpose.msra.mxu0 0.0
    %484 = vmatprep.subr.mxu0 0.0
    %485 = vmatpush1.xpose.msra.mxu0 0.0
    %486 = vmatprep.subr.mxu0 0.0
    %487 = vmatpush1.xpose.msra.mxu0 0.0
    %488 = vmatprep.subr.mxu0 0.0
    %489 = vmatpush1.xpose.msra.mxu0 0.0
    %490 = vmatprep.subr.mxu0 0.0
    %491 = vmatpush1.xpose.msra.mxu0 0.0
    %492 = vmatprep.subr.mxu0 0.0
    %493 = vmatpush1.xpose.msra.mxu0 0.0
    %494 = vmatprep.subr.mxu0 0.0
    %495 = vmatpush1.xpose.msra.mxu0 0.0
    %496 = vmatprep.subr.mxu0 0.0
    %497 = vmatpush1.xpose.msra.mxu0 0.0
    %498 = vmatprep.subr.mxu0 0.0
    %499 = vmatpush1.xpose.msra.mxu0 0.0
    %500 = vmatprep.subr.mxu0 0.0
    %501 = vmatpush1.xpose.msra.mxu0 0.0
    %502 = vmatprep.subr.mxu0 0.0
    %503 = vmatpush1.xpose.msra.mxu0 0.0
    %504 = vmatprep.subr.mxu0 0.0
    %505 = vmatpush1.xpose.msra.mxu0 0.0
    %506 = vmatprep.subr.mxu0 0.0
    %507 = vmatpush1.xpose.msra.mxu0 0.0
    %508 = vmatprep.subr.mxu0 0.0
    %509 = vmatpush1.xpose.msra.mxu0 0.0
    %510 = vmatprep.subr.mxu0 0.0
    %511 = vmatpush1.xpose.msra.mxu0 0.0
    %512 = vmatprep.subr.mxu0 0.0
    %513 = vmatpush1.xpose.msra.mxu0 0.0
    %514 = vmatprep.mubr.f32.mxu0 0.0
    %515 = vmatmul.mubr.f32.gmra.mrb[0].mxu0 %v421
    %v516 = vpop.f32.mrb[0].mxu0
    %v517 = vadd.f32 0.0, %v516
    %v518 = vpop.f32.mrb[0].mxu0
    %519 = vmatprep.mubr.f32.mxu0 0.0
    %520 = vmatmul.mubr.f32.gmra.mrb[0].mxu0 %v424
    %v521 = vpop.f32.mrb[0].mxu0
    %v522 = vadd.f32 0.0, %v521
    %v523 = vpop.f32.mrb[0].mxu0
    %524 = vmatprep.mubr.f32.mxu0 0.0
    %525 = vmatmul.mubr.f32.gmra.mrb[0].mxu0 %v427
    %v526 = vpop.f32.mrb[0].mxu0
    %v527 = vadd.f32 0.0, %v526
    %v528 = vpop.f32.mrb[0].mxu0
    %529 = vmatprep.mubr.f32.mxu0 0.0
    %530 = vmatmul.mubr.f32.gmra.mrb[0].mxu0 %v430
    %v531 = vpop.f32.mrb[0].mxu0
    %v532 = vadd.f32 0.0, %v531
    %v533 = vpop.f32.mrb[0].mxu0
    %534 = vmatprep.mubr.f32.mxu0 0.0
    %535 = vmatmul.mubr.f32.gmra.mrb[0].mxu0 %v433
    %v536 = vpop.f32.mrb[0].mxu0
    %v537 = vadd.f32 0.0, %v536
    %v538 = vpop.f32.mrb[0].mxu0
    %539 = vmatprep.mubr.f32.mxu0 0.0
    %540 = vmatmul.mubr.f32.gmra.mrb[0].mxu0 %v436
    %v541 = vpop.f32.mrb[0].mxu0
    %v542 = vadd.f32 0.0, %v541
    %v543 = vpop.f32.mrb[0].mxu0
    %544 = vmatprep.mubr.f32.mxu0 0.0
    %545 = vmatmul.mubr.f32.gmra.mrb[0].mxu0 %v439
    %v546 = vpop.f32.mrb[0].mxu0
    %v547 = vadd.f32 0.0, %v546
    %v548 = vpop.f32.mrb[0].mxu0
    %549 = vmatprep.mubr.f32.mxu0 0.0
    %550 = vmatmul.mubr.f32.gmra.mrb[0].mxu0 %v442
    %v551 = vpop.f32.mrb[0].mxu0
    %v552 = vadd.f32 0.0, %v551
    %v553 = vpop.f32.mrb[0].mxu0
    %554 = vdwg.mxu0
    %v555 = vmul.f32 %v517, 0.35355338
    %v556 = vmul.f32 %v522, 0.35355338
    %v557 = vmul.f32 %v527, 0.35355338
    %v558 = vmul.f32 %v532, 0.35355338
    %v559 = vmul.f32 %v537, 0.35355338
    %v560 = vmul.f32 %v542, 0.35355338
    %v561 = vmul.f32 %v547, 0.35355338
    %v562 = vmul.f32 %v552, 0.35355338
    %v563 = vadd.f32 %v555, %v111
    %v564 = vadd.f32 %v556, %v112
    %v565 = vadd.f32 %v557, %v113
    %v566 = vadd.f32 %v558, %v114
    %v567 = vadd.f32 %v559, %v115
    %v568 = vadd.f32 %v560, %v116
    %v569 = vadd.f32 %v561, %v117
    %v570 = vadd.f32 %v562, %v118
    %vm571 = vcmask 130048
    %v572 = vsel %vm571, %v563, -inf
    %573 = vmax.xlane.f32.xlu0 %v572
    %v574 = vpop.xlane.xlu0 %573
    %v575 = vsel %vm571, %v564, -inf
    %576 = vmax.xlane.f32.xlu0 %v575
    %v577 = vpop.xlane.xlu0 %576
    %v578 = vsel %vm571, %v565, -inf
    %579 = vmax.xlane.f32.xlu0 %v578
    %v580 = vpop.xlane.xlu0 %579
    %v581 = vsel %vm571, %v566, -inf
    %582 = vmax.xlane.f32.xlu0 %v581
    %v583 = vpop.xlane.xlu0 %582
    %v584 = vsel %vm571, %v567, -inf
    %585 = vmax.xlane.f32.xlu0 %v584
    %v586 = vpop.xlane.xlu0 %585
    %v587 = vsel %vm571, %v568, -inf
    %588 = vmax.xlane.f32.xlu0 %v587
    %v589 = vpop.xlane.xlu0 %588
    %v590 = vsel %vm571, %v569, -inf
    %591 = vmax.xlane.f32.xlu0 %v590
    %v592 = vpop.xlane.xlu0 %591
    %v593 = vsel %vm571, %v570, -inf
    %594 = vmax.xlane.f32.xlu0 %v593
    %v595 = vpop.xlane.xlu0 %594
    %v596 = vsub.f32 %v563, %v574
    %v597 = vsub.f32 %v564, %v577
    %v598 = vsub.f32 %v565, %v580
    %v599 = vsub.f32 %v566, %v583
    %v600 = vsub.f32 %v567, %v586
    %v601 = vsub.f32 %v568, %v589
    %v602 = vsub.f32 %v569, %v592
    %v603 = vsub.f32 %v570, %v595
    %v604 = vmul.f32 %v596, 1.442695
    %v605 = vpow.pop %v604
    %v606 = vmul.f32 %v597, 1.442695
    %v607 = vpow.pop %v606
    %v608 = vmul.f32 %v598, 1.442695
    %v609 = vpow.pop %v608
    %v610 = vmul.f32 %v599, 1.442695
    %v611 = vpow.pop %v610
    %v612 = vmul.f32 %v600, 1.442695
    %v613 = vpow.pop %v612
    %v614 = vmul.f32 %v601, 1.442695
    %v615 = vpow.pop %v614
    %v616 = vmul.f32 %v602, 1.442695
    %v617 = vpow.pop %v616
    %v618 = vmul.f32 %v603, 1.442695
    %v619 = vpow.pop %v618
    %v620 = vsel %vm571, %v605, 0.0
    %621 = vadd.xlane.f32.xlu0 %v620
    %v622 = vpop.xlane.xlu0 %621
    %v623 = vsel %vm571, %v607, 0.0
    %624 = vadd.xlane.f32.xlu0 %v623
    %v625 = vpop.xlane.xlu0 %624
    %v626 = vsel %vm571, %v609, 0.0
    %627 = vadd.xlane.f32.xlu0 %v626
    %v628 = vpop.xlane.xlu0 %627
    %v629 = vsel %vm571, %v611, 0.0
    %630 = vadd.xlane.f32.xlu0 %v629
    %v631 = vpop.xlane.xlu0 %630
    %v632 = vsel %vm571, %v613, 0.0
    %633 = vadd.xlane.f32.xlu0 %v632
    %v634 = vpop.xlane.xlu0 %633
    %v635 = vsel %vm571, %v615, 0.0
    %636 = vadd.xlane.f32.xlu0 %v635
    %v637 = vpop.xlane.xlu0 %636
    %v638 = vsel %vm571, %v617, 0.0
    %639 = vadd.xlane.f32.xlu0 %v638
    %v640 = vpop.xlane.xlu0 %639
    %v641 = vsel %vm571, %v619, 0.0
    %642 = vadd.xlane.f32.xlu0 %v641
    %v643 = vpop.xlane.xlu0 %642
    %v644 = vrcp.pop %v622
    %v645 = vrcp.pop %v625
    %v646 = vrcp.pop %v628
    %v647 = vrcp.pop %v631
    %v648 = vrcp.pop %v634
    %v649 = vrcp.pop %v637
    %v650 = vrcp.pop %v640
    %v651 = vrcp.pop %v643
    %v652 = vmul.f32 %v605, %v644
    %v653 = vmul.f32 %v607, %v645
    %v654 = vmul.f32 %v609, %v646
    %v655 = vmul.f32 %v611, %v647
    %v656 = vmul.f32 %v613, %v648
    %v657 = vmul.f32 %v615, %v649
    %v658 = vmul.f32 %v617, %v650
    %v659 = vmul.f32 %v619, %v651
    %v661 = vsel %vm571, %v652, 0
    %v664 = vsel %vm571, %v653, 0
    %v667 = vsel %vm571, %v654, 0
    %v670 = vsel %vm571, %v655, 0
    %v673 = vsel %vm571, %v656, 0
    %v676 = vsel %vm571, %v657, 0
    %v679 = vsel %vm571, %v658, 0
    %v682 = vsel %vm571, %v659, 0
    %684 = vmatprep.subr.mxu0 0.0
    %685 = vmatpush1.msra.mxu0 %v404
    %686 = vmatprep.subr.mxu0 0.0
    %687 = vmatpush1.msra.mxu0 %v409
    %688 = vmatprep.subr.mxu0 0.0
    %689 = vmatpush1.msra.mxu0 0.0
    %690 = vmatprep.subr.mxu0 0.0
    %691 = vmatpush1.msra.mxu0 0.0
    %692 = vmatprep.subr.mxu0 0.0
    %693 = vmatpush1.msra.mxu0 0.0
    %694 = vmatprep.subr.mxu0 0.0
    %695 = vmatpush1.msra.mxu0 0.0
    %696 = vmatprep.subr.mxu0 0.0
    %697 = vmatpush1.msra.mxu0 0.0
    %698 = vmatprep.subr.mxu0 0.0
    %699 = vmatpush1.msra.mxu0 0.0
    %700 = vmatprep.subr.mxu0 0.0
    %701 = vmatpush1.msra.mxu0 0.0
    %702 = vmatprep.subr.mxu0 0.0
    %703 = vmatpush1.msra.mxu0 0.0
    %704 = vmatprep.subr.mxu0 0.0
    %705 = vmatpush1.msra.mxu0 0.0
    %706 = vmatprep.subr.mxu0 0.0
    %707 = vmatpush1.msra.mxu0 0.0
    %708 = vmatprep.subr.mxu0 0.0
    %709 = vmatpush1.msra.mxu0 0.0
    %710 = vmatprep.subr.mxu0 0.0
    %711 = vmatpush1.msra.mxu0 0.0
    %712 = vmatprep.subr.mxu0 0.0
    %713 = vmatpush1.msra.mxu0 0.0
    %714 = vmatprep.subr.mxu0 0.0
    %715 = vmatpush1.msra.mxu0 0.0
    %716 = vmatprep.subr.mxu0 0.0
    %717 = vmatpush1.msra.mxu0 0.0
    %718 = vmatprep.subr.mxu0 0.0
    %719 = vmatpush1.msra.mxu0 0.0
    %720 = vmatprep.subr.mxu0 0.0
    %721 = vmatpush1.msra.mxu0 0.0
    %722 = vmatprep.subr.mxu0 0.0
    %723 = vmatpush1.msra.mxu0 0.0
    %724 = vmatprep.subr.mxu0 0.0
    %725 = vmatpush1.msra.mxu0 0.0
    %726 = vmatprep.subr.mxu0 0.0
    %727 = vmatpush1.msra.mxu0 0.0
    %728 = vmatprep.subr.mxu0 0.0
    %729 = vmatpush1.msra.mxu0 0.0
    %730 = vmatprep.subr.mxu0 0.0
    %731 = vmatpush1.msra.mxu0 0.0
    %732 = vmatprep.subr.mxu0 0.0
    %733 = vmatpush1.msra.mxu0 0.0
    %734 = vmatprep.subr.mxu0 0.0
    %735 = vmatpush1.msra.mxu0 0.0
    %736 = vmatprep.subr.mxu0 0.0
    %737 = vmatpush1.msra.mxu0 0.0
    %738 = vmatprep.subr.mxu0 0.0
    %739 = vmatpush1.msra.mxu0 0.0
    %740 = vmatprep.subr.mxu0 0.0
    %741 = vmatpush1.msra.mxu0 0.0
    %742 = vmatprep.subr.mxu0 0.0
    %743 = vmatpush1.msra.mxu0 0.0
    %744 = vmatprep.subr.mxu0 0.0
    %745 = vmatpush1.msra.mxu0 0.0
    %746 = vmatprep.subr.mxu0 0.0
    %747 = vmatpush1.msra.mxu0 0.0
    %748 = vmatprep.mubr.f32.mxu0 0.0
    %749 = vmatmul.mubr.f32.gmra.mrb[0].mxu0 %v661
    %v750 = vpop.f32.mrb[0].mxu0
    %v751 = vadd.f32 0.0, %v750
    %v752 = vpop.f32.mrb[0].mxu0
    %753 = vmatprep.mubr.f32.mxu0 0.0
    %754 = vmatmul.mubr.f32.gmra.mrb[0].mxu0 %v664
    %v755 = vpop.f32.mrb[0].mxu0
    %v756 = vadd.f32 0.0, %v755
    %v757 = vpop.f32.mrb[0].mxu0
    %758 = vmatprep.mubr.f32.mxu0 0.0
    %759 = vmatmul.mubr.f32.gmra.mrb[0].mxu0 %v667
    %v760 = vpop.f32.mrb[0].mxu0
    %v761 = vadd.f32 0.0, %v760
    %v762 = vpop.f32.mrb[0].mxu0
    %763 = vmatprep.mubr.f32.mxu0 0.0
    %764 = vmatmul.mubr.f32.gmra.mrb[0].mxu0 %v670
    %v765 = vpop.f32.mrb[0].mxu0
    %v766 = vadd.f32 0.0, %v765
    %v767 = vpop.f32.mrb[0].mxu0
    %768 = vmatprep.mubr.f32.mxu0 0.0
    %769 = vmatmul.mubr.f32.gmra.mrb[0].mxu0 %v673
    %v770 = vpop.f32.mrb[0].mxu0
    %v771 = vadd.f32 0.0, %v770
    %v772 = vpop.f32.mrb[0].mxu0
    %773 = vmatprep.mubr.f32.mxu0 0.0
    %774 = vmatmul.mubr.f32.gmra.mrb[0].mxu0 %v676
    %v775 = vpop.f32.mrb[0].mxu0
    %v776 = vadd.f32 0.0, %v775
    %v777 = vpop.f32.mrb[0].mxu0
    %778 = vmatprep.mubr.f32.mxu0 0.0
    %779 = vmatmul.mubr.f32.gmra.mrb[0].mxu0 %v679
    %v780 = vpop.f32.mrb[0].mxu0
    %v781 = vadd.f32 0.0, %v780
    %v782 = vpop.f32.mrb[0].mxu0
    %783 = vmatprep.mubr.f32.mxu0 0.0
    %784 = vmatmul.mubr.f32.gmra.mrb[0].mxu0 %v682
    %v785 = vpop.f32.mrb[0].mxu0
    %v786 = vadd.f32 0.0, %v785
    %v787 = vpop.f32.mrb[0].mxu0
    %788 = vdwg.mxu0
    %v789 = vmul.f32 %v751, %v103
    %v790 = vmul.f32 %v756, %v104
    %v791 = vmul.f32 %v761, %v105
    %v792 = vmul.f32 %v766, %v106
    %v793 = vmul.f32 %v771, %v107
    %v794 = vmul.f32 %v776, %v108
    %v795 = vmul.f32 %v781, %v109
    %v796 = vmul.f32 %v786, %v110
    %v797 = vadd.f32 %v789, %v791
    %v798 = vadd.f32 %v790, %v792
    %v799 = vadd.f32 %v797, %v793
    %v800 = vadd.f32 %v798, %v794
    %v801 = vadd.f32 %v799, %v795
    %v802 = vadd.f32 %v800, %v796
    %v804 = vlaneseq
    %v805 = vshrl.u32 %v804, 7
    %v806 = vsub.s32 0, %v805
    %v807 = vrot.slane %v88, %v806
    %v810 = vsel %vm119, %v801, 0
    %v813 = vsel %vm119, %v802, 0
    %815 = vmatprep.subr.mxu0 0.0
    %816 = vmatpush1.msra.mxu0 %v84
    %817 = vmatprep.subr.mxu0 0.0
    %818 = vmatpush1.msra.mxu0 %v85
    %819 = vmatprep.subr.mxu0 0.0
    %820 = vmatpush1.msra.mxu0 %v86
    %821 = vmatprep.subr.mxu0 0.0
    %822 = vmatpush1.msra.mxu0 %v87
    %823 = vmatprep.subr.mxu0 0.0
    %824 = vmatpush1.msra.mxu0 0.0
    %825 = vmatprep.subr.mxu0 0.0
    %826 = vmatpush1.msra.mxu0 0.0
    %827 = vmatprep.subr.mxu0 0.0
    %828 = vmatpush1.msra.mxu0 0.0
    %829 = vmatprep.subr.mxu0 0.0
    %830 = vmatpush1.msra.mxu0 0.0
    %831 = vmatprep.subr.mxu0 0.0
    %832 = vmatpush1.msra.mxu0 0.0
    %833 = vmatprep.subr.mxu0 0.0
    %834 = vmatpush1.msra.mxu0 0.0
    %835 = vmatprep.subr.mxu0 0.0
    %836 = vmatpush1.msra.mxu0 0.0
    %837 = vmatprep.subr.mxu0 0.0
    %838 = vmatpush1.msra.mxu0 0.0
    %839 = vmatprep.subr.mxu0 0.0
    %840 = vmatpush1.msra.mxu0 0.0
    %841 = vmatprep.subr.mxu0 0.0
    %842 = vmatpush1.msra.mxu0 0.0
    %843 = vmatprep.subr.mxu0 0.0
    %844 = vmatpush1.msra.mxu0 0.0
    %845 = vmatprep.subr.mxu0 0.0
    %846 = vmatpush1.msra.mxu0 0.0
    %847 = vmatprep.subr.mxu0 0.0
    %848 = vmatpush1.msra.mxu0 0.0
    %849 = vmatprep.subr.mxu0 0.0
    %850 = vmatpush1.msra.mxu0 0.0
    %851 = vmatprep.subr.mxu0 0.0
    %852 = vmatpush1.msra.mxu0 0.0
    %853 = vmatprep.subr.mxu0 0.0
    %854 = vmatpush1.msra.mxu0 0.0
    %855 = vmatprep.subr.mxu0 0.0
    %856 = vmatpush1.msra.mxu0 0.0
    %857 = vmatprep.subr.mxu0 0.0
    %858 = vmatpush1.msra.mxu0 0.0
    %859 = vmatprep.subr.mxu0 0.0
    %860 = vmatpush1.msra.mxu0 0.0
    %861 = vmatprep.subr.mxu0 0.0
    %862 = vmatpush1.msra.mxu0 0.0
    %863 = vmatprep.subr.mxu0 0.0
    %864 = vmatpush1.msra.mxu0 0.0
    %865 = vmatprep.subr.mxu0 0.0
    %866 = vmatpush1.msra.mxu0 0.0
    %867 = vmatprep.subr.mxu0 0.0
    %868 = vmatpush1.msra.mxu0 0.0
    %869 = vmatprep.subr.mxu0 0.0
    %870 = vmatpush1.msra.mxu0 0.0
    %871 = vmatprep.subr.mxu0 0.0
    %872 = vmatpush1.msra.mxu0 0.0
    %873 = vmatprep.subr.mxu0 0.0
    %874 = vmatpush1.msra.mxu0 0.0
    %875 = vmatprep.subr.mxu0 0.0
    %876 = vmatpush1.msra.mxu0 0.0
    %877 = vmatprep.subr.mxu0 0.0
    %878 = vmatpush1.msra.mxu0 0.0
    %879 = vmatprep.mubr.f32.mxu0 0.0
    %880 = vmatmul.mubr.f32.gmra.mrb[0].mxu0 %v810
    %v881 = vpop.f32.mrb[0].mxu0
    %v882 = vadd.f32 %v807, %v881
    %v883 = vpop.f32.mrb[0].mxu0
    %884 = vmatprep.mubr.f32.mxu0 0.0
    %885 = vmatmul.mubr.f32.gmra.mrb[0].mxu0 %v813
    %v886 = vpop.f32.mrb[0].mxu0
    %v887 = vadd.f32 %v807, %v886
    %v888 = vpop.f32.mrb[0].mxu0
    %889 = vdwg.mxu0
    %v890 = vadd.f32 %v63, %v882
    %v891 = vadd.f32 %v64, %v887
    %v892 = vsel %vm119, %v890, 0.0
    %893 = vadd.xlane.f32.xlu0 %v892
    %v894 = vpop.xlane.xlu0 %893
    %v895 = vsel %vm119, %v891, 0.0
    %896 = vadd.xlane.f32.xlu0 %v895
    %v897 = vpop.xlane.xlu0 %896
    %v898 = vmul.f32 %v894, %v126
    %v899 = vmul.f32 %v897, %v126
    %v900 = vsub.f32 %v890, %v898
    %v901 = vsub.f32 %v891, %v899
    %v902 = vmul.f32 %v900, %v900
    %v903 = vmul.f32 %v901, %v901
    %v904 = vsel %vm119, %v902, 0.0
    %905 = vadd.xlane.f32.xlu0 %v904
    %v906 = vpop.xlane.xlu0 %905
    %v907 = vsel %vm119, %v903, 0.0
    %908 = vadd.xlane.f32.xlu0 %v907
    %v909 = vpop.xlane.xlu0 %908
    %v910 = vmul.f32 %v906, %v126
    %v911 = vmul.f32 %v909, %v126
    %v912 = vadd.f32 %v910, 1e-05
    %v913 = vadd.f32 %v911, 1e-05
    %v914 = vrsqrt.pop %v912
    %v915 = vrsqrt.pop %v913
    %v916 = vmul.f32 %v900, %v914
    %v917 = vmul.f32 %v901, %v915
    %v919 = vlaneseq
    %v920 = vshrl.u32 %v919, 7
    %v921 = vsub.s32 0, %v920
    %v922 = vrot.slane %v67, %v921
    %v924 = vmul.f32 %v916, %v922
    %v925 = vmul.f32 %v917, %v922
    %v927 = vlaneseq
    %v928 = vshrl.u32 %v927, 7
    %v929 = vsub.s32 0, %v928
    %v930 = vrot.slane %v68, %v929
    %v932 = vadd.f32 %v924, %v930
    %v933 = vadd.f32 %v925, %v930
    %v935 = vlaneseq
    %v936 = vshrl.u32 %v935, 7
    %v937 = vsub.s32 0, %v936
    %v938 = vrot.slane %v93, %v937
    %v941 = vsel %vm119, %v932, 0
    %v944 = vsel %vm119, %v933, 0
    %946 = vmatprep.subr.mxu0 0.0
    %947 = vmatpush1.msra.mxu0 %v89
    %948 = vmatprep.subr.mxu0 0.0
    %949 = vmatpush1.msra.mxu0 %v90
    %950 = vmatprep.subr.mxu0 0.0
    %951 = vmatpush1.msra.mxu0 %v91
    %952 = vmatprep.subr.mxu0 0.0
    %953 = vmatpush1.msra.mxu0 %v92
    %954 = vmatprep.subr.mxu0 0.0
    %955 = vmatpush1.msra.mxu0 0.0
    %956 = vmatprep.subr.mxu0 0.0
    %957 = vmatpush1.msra.mxu0 0.0
    %958 = vmatprep.subr.mxu0 0.0
    %959 = vmatpush1.msra.mxu0 0.0
    %960 = vmatprep.subr.mxu0 0.0
    %961 = vmatpush1.msra.mxu0 0.0
    %962 = vmatprep.subr.mxu0 0.0
    %963 = vmatpush1.msra.mxu0 0.0
    %964 = vmatprep.subr.mxu0 0.0
    %965 = vmatpush1.msra.mxu0 0.0
    %966 = vmatprep.subr.mxu0 0.0
    %967 = vmatpush1.msra.mxu0 0.0
    %968 = vmatprep.subr.mxu0 0.0
    %969 = vmatpush1.msra.mxu0 0.0
    %970 = vmatprep.subr.mxu0 0.0
    %971 = vmatpush1.msra.mxu0 0.0
    %972 = vmatprep.subr.mxu0 0.0
    %973 = vmatpush1.msra.mxu0 0.0
    %974 = vmatprep.subr.mxu0 0.0
    %975 = vmatpush1.msra.mxu0 0.0
    %976 = vmatprep.subr.mxu0 0.0
    %977 = vmatpush1.msra.mxu0 0.0
    %978 = vmatprep.subr.mxu0 0.0
    %979 = vmatpush1.msra.mxu0 0.0
    %980 = vmatprep.subr.mxu0 0.0
    %981 = vmatpush1.msra.mxu0 0.0
    %982 = vmatprep.subr.mxu0 0.0
    %983 = vmatpush1.msra.mxu0 0.0
    %984 = vmatprep.subr.mxu0 0.0
    %985 = vmatpush1.msra.mxu0 0.0
    %986 = vmatprep.subr.mxu0 0.0
    %987 = vmatpush1.msra.mxu0 0.0
    %988 = vmatprep.subr.mxu0 0.0
    %989 = vmatpush1.msra.mxu0 0.0
    %990 = vmatprep.subr.mxu0 0.0
    %991 = vmatpush1.msra.mxu0 0.0
    %992 = vmatprep.subr.mxu0 0.0
    %993 = vmatpush1.msra.mxu0 0.0
    %994 = vmatprep.subr.mxu0 0.0
    %995 = vmatpush1.msra.mxu0 0.0
    %996 = vmatprep.subr.mxu0 0.0
    %997 = vmatpush1.msra.mxu0 0.0
    %998 = vmatprep.subr.mxu0 0.0
    %999 = vmatpush1.msra.mxu0 0.0
    %1000 = vmatprep.subr.mxu0 0.0
    %1001 = vmatpush1.msra.mxu0 0.0
    %1002 = vmatprep.subr.mxu0 0.0
    %1003 = vmatpush1.msra.mxu0 0.0
    %1004 = vmatprep.subr.mxu0 0.0
    %1005 = vmatpush1.msra.mxu0 0.0
    %1006 = vmatprep.subr.mxu0 0.0
    %1007 = vmatpush1.msra.mxu0 0.0
    %1008 = vmatprep.subr.mxu0 0.0
    %1009 = vmatpush1.msra.mxu0 0.0
    %1010 = vmatprep.mubr.f32.mxu0 0.0
    %1011 = vmatmul.mubr.f32.gmra.mrb[0].mxu0 %v941
    %v1012 = vpop.f32.mrb[0].mxu0
    %v1013 = vadd.f32 %v938, %v1012
    %v1014 = vpop.f32.mrb[0].mxu0
    %1015 = vmatprep.mubr.f32.mxu0 0.0
    %1016 = vmatmul.mubr.f32.gmra.mrb[0].mxu0 %v944
    %v1017 = vpop.f32.mrb[0].mxu0
    %v1018 = vadd.f32 %v938, %v1017
    %v1019 = vpop.f32.mrb[0].mxu0
    %1020 = vdwg.mxu0
    %v1021 = vmul.f32 %v1013, %v1013
    %v1022 = vmul.f32 %v1018, %v1018
    %v1023 = vmul.f32 %v1013, %v1021
    %v1024 = vmul.f32 %v1018, %v1022
    %v1025 = vmul.f32 %v1023, 0.044715
    %v1026 = vmul.f32 %v1024, 0.044715
    %v1027 = vadd.f32 %v1013, %v1025
    %v1028 = vadd.f32 %v1018, %v1026
    %v1029 = vmul.f32 %v1027, 0.7978846
    %v1030 = vmul.f32 %v1028, 0.7978846
    %v1031 = vtanh.pop %v1029
    %v1032 = vtanh.pop %v1030
    %v1033 = vadd.f32 %v1031, 1.0
    %v1034 = vadd.f32 %v1032, 1.0
    %v1035 = vmul.f32 %v1033, 0.5
    %v1036 = vmul.f32 %v1034, 0.5
    %v1037 = vmul.f32 %v1013, %v1035
    %v1038 = vmul.f32 %v1018, %v1036
    %v1040 = vlaneseq
    %v1041 = vshrl.u32 %v1040, 7
    %v1042 = vsub.s32 0, %v1041
    %v1043 = vrot.slane %v102, %v1042
    %vm1045 = vcmask 523264
    %v1047 = vsel %vm1045, %v1037, 0
    %v1050 = vsel %vm1045, %v1038, 0
    %1052 = vmatprep.subr.mxu0 0.0
    %1053 = vmatpush1.msra.mxu0 %v94
    %1054 = vmatprep.subr.mxu0 0.0
    %1055 = vmatpush1.msra.mxu0 %v95
    %1056 = vmatprep.subr.mxu0 0.0
    %1057 = vmatpush1.msra.mxu0 %v96
    %1058 = vmatprep.subr.mxu0 0.0
    %1059 = vmatpush1.msra.mxu0 %v97
    %1060 = vmatprep.subr.mxu0 0.0
    %1061 = vmatpush1.msra.mxu0 %v98
    %1062 = vmatprep.subr.mxu0 0.0
    %1063 = vmatpush1.msra.mxu0 %v99
    %1064 = vmatprep.subr.mxu0 0.0
    %1065 = vmatpush1.msra.mxu0 %v100
    %1066 = vmatprep.subr.mxu0 0.0
    %1067 = vmatpush1.msra.mxu0 %v101
    %1068 = vmatprep.subr.mxu0 0.0
    %1069 = vmatpush1.msra.mxu0 0.0
    %1070 = vmatprep.subr.mxu0 0.0
    %1071 = vmatpush1.msra.mxu0 0.0
    %1072 = vmatprep.subr.mxu0 0.0
    %1073 = vmatpush1.msra.mxu0 0.0
    %1074 = vmatprep.subr.mxu0 0.0
    %1075 = vmatpush1.msra.mxu0 0.0
    %1076 = vmatprep.subr.mxu0 0.0
    %1077 = vmatpush1.msra.mxu0 0.0
    %1078 = vmatprep.subr.mxu0 0.0
    %1079 = vmatpush1.msra.mxu0 0.0
    %1080 = vmatprep.subr.mxu0 0.0
    %1081 = vmatpush1.msra.mxu0 0.0
    %1082 = vmatprep.subr.mxu0 0.0
    %1083 = vmatpush1.msra.mxu0 0.0
    %1084 = vmatprep.subr.mxu0 0.0
    %1085 = vmatpush1.msra.mxu0 0.0
    %1086 = vmatprep.subr.mxu0 0.0
    %1087 = vmatpush1.msra.mxu0 0.0
    %1088 = vmatprep.subr.mxu0 0.0
    %1089 = vmatpush1.msra.mxu0 0.0
    %1090 = vmatprep.subr.mxu0 0.0
    %1091 = vmatpush1.msra.mxu0 0.0
    %1092 = vmatprep.subr.mxu0 0.0
    %1093 = vmatpush1.msra.mxu0 0.0
    %1094 = vmatprep.subr.mxu0 0.0
    %1095 = vmatpush1.msra.mxu0 0.0
    %1096 = vmatprep.subr.mxu0 0.0
    %1097 = vmatpush1.msra.mxu0 0.0
    %1098 = vmatprep.subr.mxu0 0.0
    %1099 = vmatpush1.msra.mxu0 0.0
    %1100 = vmatprep.subr.mxu0 0.0
    %1101 = vmatpush1.msra.mxu0 0.0
    %1102 = vmatprep.subr.mxu0 0.0
    %1103 = vmatpush1.msra.mxu0 0.0
    %1104 = vmatprep.subr.mxu0 0.0
    %1105 = vmatpush1.msra.mxu0 0.0
    %1106 = vmatprep.subr.mxu0 0.0
    %1107 = vmatpush1.msra.mxu0 0.0
    %1108 = vmatprep.subr.mxu0 0.0
    %1109 = vmatpush1.msra.mxu0 0.0
    %1110 = vmatprep.subr.mxu0 0.0
    %1111 = vmatpush1.msra.mxu0 0.0
    %1112 = vmatprep.subr.mxu0 0.0
    %1113 = vmatpush1.msra.mxu0 0.0
    %1114 = vmatprep.subr.mxu0 0.0
    %1115 = vmatpush1.msra.mxu0 0.0
    %1116 = vmatprep.mubr.f32.mxu0 0.0
    %1117 = vmatmul.mubr.f32.gmra.mrb[0].mxu0 %v1047
    %v1118 = vpop.f32.mrb[0].mxu0
    %v1119 = vadd.f32 %v1043, %v1118
    %v1120 = vpop.f32.mrb[0].mxu0
    %1121 = vmatprep.mubr.f32.mxu0 0.0
    %1122 = vmatmul.mubr.f32.gmra.mrb[0].mxu0 %v1050
    %v1123 = vpop.f32.mrb[0].mxu0
    %v1124 = vadd.f32 %v1043, %v1123
    %v1125 = vpop.f32.mrb[0].mxu0
    %1126 = vdwg.mxu0
    %v1127 = vadd.f32 %v890, %v1119
    %v1128 = vadd.f32 %v891, %v1124
    %1129 = vst.msk [vmem:[#allocation2] sm:$0xff] %vm119, %v1127
    %1130 = vst.msk [vmem:[#allocation2 + $0x8] sm:$0xff] %vm119, %v1128
    // Predicated region
    $region78: #{transformer_encoder_layer.1} parent=1 // pred_check
      _
    $region79: #{transformer_encoder_layer.1} parent=1 // pred_check_branch
      %1132 = sbr.rel (0) target = $region81
    $region80: #{transformer_encoder_layer.1} parent=1 // pred_region
      %s1134 = ssub.s32 256, 256
      %1135 = vsyncadd [#allocation3], %s1134
      %s1136 = sshll.u32 [#allocation2], 4
      %s1137 = int_to_ptr.vmem [resolvable:$true] %s1136
      %1142 = dma.vmem_to_hbm [thread:$0]  %s1137, 256, %s19, [#allocation3], 128, 128, 8
    $region81: #{transformer_encoder_layer.1} parent=1 // pred_fallthru
      _
    // Predicated region
    $region82: #{transformer_encoder_layer.1} parent=1 // pred_check
      _
    $region83: #{transformer_encoder_layer.1} parent=1 // pred_check_branch
      %1144 = sbr.rel (0) target = $region85
    $region84: #{transformer_encoder_layer.1} parent=1 // pred_region
      %1145 = dma.done [#allocation3], 256
    $region85: #{transformer_encoder_layer.1} parent=1 // pred_fallthru
      _
    %1146 = vsyncpa [#allocation3], 1

</llo_original>
